<compile_context>
chip_gen: v7x
topology: tpu7x:2x2x1
jax: 0.10.0
libtpu: 0.0.40
codegen_flags: <defaults>
</compile_context>

<pallas_src>
import jax
import jax.numpy as jnp
from jax.experimental import pallas as pl
from jax.experimental.pallas import tpu as pltpu


F_IN = 8          # Linear in_features
F_OUT = 128       # Linear out_features
OUT_COLS = 112    # 64 + 32 + 16 (permuted split+cat width)
TM_CAP = 2048     # batch-tile cap (multiple of 8); sweepable 2048-4096


def _relu_linear_kernel(x_ref, w_ref, b_ref, o_ref):
    # relu on VPU, matmul on MXU (f32 accumulate), bias add on VPU.
    v1 = jnp.maximum(x_ref[...], 0.0)
    acc = jnp.dot(v1, w_ref[...], preferred_element_type=jnp.float32)
    o_ref[...] = (acc + b_ref[...]).astype(o_ref.dtype)


def relu_linear_permuted(x, w_perm, b_perm):
    """x: (N, 8); w_perm: (8, 112); b_perm: (1, 112). Returns (N, 112)."""
    n, f_in = x.shape
    out_cols = w_perm.shape[1]

    # Batch tile: whole batch if it fits the cap (block == full dim is always
    # legal), otherwise TM_CAP (multiple of 8). For N > TM_CAP the grid has
    # >= 2 steps, so v7x's two TensorCores both get work.
    tm = n if n <= TM_CAP else TM_CAP
    grid = (pl.cdiv(n, tm),)

    # VMEM accounting with lane padding: the (tm, 8) f32 input block is stored
    # 8 -> 128-lane padded (tm*128*4 bytes), same as the (tm, 112) output
    # block. Double-buffered in + out, plus headroom for weights/bias/internal.
    per_step_bytes = 2 * (tm * 128 * 4)            # input block + output block
    vmem_limit = min(max(2 * per_step_bytes + (2 << 20), 16 << 20), 48 << 20)

    cost = pl.CostEstimate(
        flops=2 * n * f_in * out_cols,
        transcendentals=0,
        bytes_accessed=4 * (n * f_in + f_in * out_cols + out_cols + n * out_cols),
    )

    return pl.pallas_call(
        _relu_linear_kernel,
        out_shape=jax.ShapeDtypeStruct((n, out_cols), x.dtype),
        grid=grid,
        in_specs=[
            # batch-tiled activations
            pl.BlockSpec((tm, f_in), lambda i: (i, 0)),
            # weight & bias: constant index_map -> VMEM-resident, no re-DMA
            pl.BlockSpec((f_in, out_cols), lambda i: (0, 0)),
            pl.BlockSpec((1, out_cols), lambda i: (0, 0)),
        ],
        out_specs=pl.BlockSpec((tm, out_cols), lambda i: (i, 0)),
        compiler_params=pltpu.CompilerParams(
            dimension_semantics=("parallel",),
            vmem_limit_bytes=vmem_limit),
        cost_estimate=cost,
    )(x, w_perm, b_perm)


class Model:
    """JAX/Pallas port of the PyTorch Model."""

    IN_FEATURES = F_IN
    OUT_FEATURES = F_OUT
    SPLIT = (64, 32, 16)        # v3, v4, v5 sizes along dim 1

    def __init__(self, key):
        kw, kb = jax.random.split(key)
        bound = 1.0 / jnp.sqrt(float(self.IN_FEATURES))
        # PyTorch Linear stores weight as (out, in); keep that convention for
        # init, then transpose + permute columns for the kernel layout.
        self.weight = jax.random.uniform(
            kw, (self.OUT_FEATURES, self.IN_FEATURES),
            minval=-bound, maxval=bound, dtype=jnp.float32)
        self.bias = jax.random.uniform(
            kb, (self.OUT_FEATURES,),
            minval=-bound, maxval=bound, dtype=jnp.float32)

        s0, s1, s2 = self.SPLIT
        # cat((v4, v3, v5)) == columns [s0:s0+s1] ++ [0:s0] ++ [s0+s1:s0+s1+s2]
        perm = jnp.concatenate([
            jnp.arange(s0, s0 + s1),
            jnp.arange(0, s0),
            jnp.arange(s0 + s1, s0 + s1 + s2),
        ])
        # (8, 112) weight / (1, 112) bias with split+cat permutation folded in.
        self.w_perm = jnp.transpose(self.weight)[:, perm]
        self.b_perm = self.bias[perm][None, :]

    def __call__(self, x):
        return relu_linear_permuted(x, self.w_perm, self.b_perm)


def _reference(model, x):
    """Plain-JAX reference of the (intended) forward pass."""
    v1 = jnp.maximum(x, 0.0)
    v2 = v1 @ jnp.transpose(model.weight) + model.bias
    v3 = v2[:, 0:64]
    v4 = v2[:, 64:96]
    v5 = v2[:, 96:112]
    return jnp.concatenate([v4, v3, v5], axis=1)


if __name__ == "__main__":
    key = jax.random.PRNGKey(0)
    k_param, k_x1, k_x2 = jax.random.split(key, 3)

    model = Model(k_param)

    # 1) Literal module input shape (1, 8): single-step grid, block == full dims.
    x_small = jax.random.normal(k_x1, (1, F_IN), dtype=jnp.float32)
    out_small = jax.block_until_ready(model(x_small))
    ref_small = _reference(model, x_small)
    assert out_small.shape == (1, OUT_COLS), out_small.shape
    assert jnp.allclose(out_small, ref_small, atol=1e-5, rtol=1e-5), \
        "small-batch Pallas kernel mismatch vs reference"

    # 2) Batched input (2560 rows): 2-step grid (2048 + 512 remainder block)
    #    exercises the pipelined, masked-remainder path.
    x_big = jax.random.normal(k_x2, (2560, F_IN), dtype=jnp.float32)
    out_big = jax.block_until_ready(model(x_big))
    ref_big = _reference(model, x_big)
    assert out_big.shape == (2560, OUT_COLS), out_big.shape
    assert jnp.allclose(out_big, ref_big, atol=1e-4, rtol=1e-4), \
        "tiled Pallas kernel mismatch vs reference"

    print("KERNEL_OK")
</pallas_src>

<mosaic_0001>
module attributes {stable_mosaic.version = 11 : i64} {
  func.func @_relu_linear_kernel(%arg0: i32, %arg1: memref<1x8xf32, #tpu.memory_space<vmem>>, %arg2: memref<8x112xf32, #tpu.memory_space<vmem>>, %arg3: memref<1x112xf32, #tpu.memory_space<vmem>>, %arg4: memref<1x112xf32, #tpu.memory_space<vmem>>) attributes {dimension_semantics = [#tpu.dimension_semantics<parallel>], iteration_bounds = array<i64: 1>, scalar_prefetch = 0 : i64, scratch_operands = 0 : i64, tpu.core_type = #tpu.core_type<tc>, window_params = [{transform_indices = @transform_0, window_bounds = array<i64: 1, 8>}, {pipeline_mode = #tpu.pipeline_mode<synchronous>, transform_indices = @transform_1, window_bounds = array<i64: 8, 112>}, {pipeline_mode = #tpu.pipeline_mode<synchronous>, transform_indices = @transform_2, window_bounds = array<i64: 1, 112>}, {transform_indices = @transform_3, window_bounds = array<i64: 1, 112>}]} {
    %c0 = arith.constant 0 : index
    %c0_0 = arith.constant 0 : index
    %0 = vector.load %arg1[%c0, %c0_0] : memref<1x8xf32, #tpu.memory_space<vmem>>, vector<1x8xf32>
    %cst = arith.constant 0.000000e+00 : f32
    %1 = vector.broadcast %cst : f32 to vector<1x8xf32>
    %2 = arith.maximumf %0, %1 : vector<1x8xf32>
    %c0_1 = arith.constant 0 : index
    %c0_2 = arith.constant 0 : index
    %3 = vector.load %arg2[%c0_1, %c0_2] : memref<8x112xf32, #tpu.memory_space<vmem>>, vector<8x112xf32>
    %cst_3 = arith.constant dense<0.000000e+00> : vector<1x112xf32>
    %4 = tpu.matmul %2, %3, %cst_3 {dimension_numbers = #tpu.dot_dimension_numbers<[1], [0], [0], [1], [0, 0, 1, 1], [], []>} : vector<1x8xf32>, vector<8x112xf32>, vector<1x112xf32> -> vector<1x112xf32>
    %c0_4 = arith.constant 0 : index
    %c0_5 = arith.constant 0 : index
    %5 = vector.load %arg3[%c0_4, %c0_5] : memref<1x112xf32, #tpu.memory_space<vmem>>, vector<1x112xf32>
    %6 = arith.addf %4, %5 : vector<1x112xf32>
    %c0_6 = arith.constant 0 : index
    %c0_7 = arith.constant 0 : index
    %7 = vector.load %arg4[%c0_6, %c0_7] : memref<1x112xf32, #tpu.memory_space<vmem>>, vector<1x112xf32>
    tpu.vector_store %arg4[%c0_6, %c0_7], %6 {strides = array<i32>} : memref<1x112xf32, #tpu.memory_space<vmem>>, vector<1x112xf32>,
    return
  }
  func.func @transform_0(%arg0: i32) -> (i32, i32) {
    %c0_i32 = arith.constant 0 : i32
    %c0_i32_0 = arith.constant 0 : i32
    return %arg0, %c0_i32 : i32, i32
  }
  func.func @transform_1(%arg0: i32) -> (i32, i32) {
    %c0_i32 = arith.constant 0 : i32
    %c0_i32_0 = arith.constant 0 : i32
    %c0_i32_1 = arith.constant 0 : i32
    return %c0_i32, %c0_i32_0 : i32, i32
  }
  func.func @transform_2(%arg0: i32) -> (i32, i32) {
    %c0_i32 = arith.constant 0 : i32
    %c0_i32_0 = arith.constant 0 : i32
    %c0_i32_1 = arith.constant 0 : i32
    return %c0_i32, %c0_i32_0 : i32, i32
  }
  func.func @transform_3(%arg0: i32) -> (i32, i32) {
    %c0_i32 = arith.constant 0 : i32
    %c0_i32_0 = arith.constant 0 : i32
    return %arg0, %c0_i32 : i32, i32
  }
}

</mosaic_0001>

<llo_original>
// kernel: tpu_custom_call.1
$region0: #{tpu_custom_call.1}
  #allocation0 [shape = 'u32[]', space=smem, size = 0x4, offset = 0x4, fixed_abs, tag = 'smem constant byte address 0x4 - core index']
  #allocation1 [shape = 'u32[144,128]{1,0:T(1,128)}', space=vmem, size = 0x12000, scoped, tag = 'internal scratch']
  %s0 = inlined_call_operand.hbm [shape: f32[1,8], index: 0, kind: input, shape index: {}]
  %s1 = inlined_call_operand.hbm [shape: f32[8,112], index: 1, kind: input, shape index: {}]
  %s2 = inlined_call_operand.vmem [shape: f32[1,112], index: 2, kind: input, shape index: {}]
  %s3 = inlined_call_operand.hbm [shape: f32[1,112], index: 3, kind: output, shape index: {}]
  %s4 = sld [smem:[#allocation0]]
  $region30: #{tpu_custom_call.1} parent=0
    _
  %s6 = ssub.s32 1, %s4
  %s7 = scalar_select 0, %s6, %s4
  $region1: #{tpu_custom_call.1} parent=0
    #allocation2 [shape = 'u8[512]{0}', space=vmem, size = 0x400, scoped, tag = 'input window, operand 0, single buffered']
    #allocation3 [shape = 's32[1]{0}', space=sflag, size = 0x4, scoped, tag = 'scoped memory for tpu_custom_call.1']
    #allocation4 [shape = 's32[1]{0}', space=sflag, size = 0x4, scoped, tag = 'scoped memory for tpu_custom_call.1']
    #allocation5 [shape = 'u8[4096]{0}', space=vmem, size = 0x1000, scoped, tag = 'input window, operand 1, single buffered']
    #allocation6 [shape = 's32[1]{0}', space=sflag, size = 0x4, scoped, tag = 'scoped memory for tpu_custom_call.1']
    #allocation7 [shape = 'u8[512]{0}', space=vmem, size = 0x400, scoped, tag = 'output window, operand 0, single buffered']
    %8 = vsyncpa [#allocation3], 0
    %9 = vsyncpa [#allocation6], 0
    %10 = vsyncpa [#allocation4], 0
    // Predicated region
    $region2: #{tpu_custom_call.1} parent=1 // pred_check
      _
    $region3: #{tpu_custom_call.1} parent=1 // pred_check_branch
      %12 = sbr.rel (0) target = $region5
    $region4: #{tpu_custom_call.1} parent=1 // pred_region
      %s14 = ssub.s32 16, 16
      %15 = vsyncadd [#allocation3], %s14
      %s17 = sshll.u32 [#allocation2], 4
      %s18 = int_to_ptr.vmem [resolvable:$true] %s17
      %20 = dma.hbm_to_vmem [thread:$0]  %s0, 16, %s18, [#allocation3]
    $region5: #{tpu_custom_call.1} parent=1 // pred_fallthru
      _
    // Predicated region
    $region6: #{tpu_custom_call.1} parent=1 // pred_check
      _
    $region7: #{tpu_custom_call.1} parent=1 // pred_check_branch
      %22 = sbr.rel (0) target = $region9
    $region8: #{tpu_custom_call.1} parent=1 // pred_region
      %s24 = ssub.s32 128, 128
      %25 = vsyncadd [#allocation6], %s24
      %s27 = sshll.u32 [#allocation5], 4
      %s28 = int_to_ptr.vmem [resolvable:$true] %s27
      %30 = dma.hbm_to_vmem [thread:$0]  %s1, 128, %s28, [#allocation6]
    $region9: #{tpu_custom_call.1} parent=1 // pred_fallthru
      _
    // Predicated region
    $region10: #{tpu_custom_call.1} parent=1 // pred_check
      _
    $region11: #{tpu_custom_call.1} parent=1 // pred_check_branch
      %32 = sbr.rel (0) target = $region13
    $region12: #{tpu_custom_call.1} parent=1 // pred_region
      _
    $region13: #{tpu_custom_call.1} parent=1 // pred_fallthru
      _
    // Predicated region
    $region14: #{tpu_custom_call.1} parent=1 // pred_check
      _
    $region15: #{tpu_custom_call.1} parent=1 // pred_check_branch
      %34 = sbr.rel (0) target = $region17
    $region16: #{tpu_custom_call.1} parent=1 // pred_region
      %35 = dma.done [#allocation3], 16
    $region17: #{tpu_custom_call.1} parent=1 // pred_fallthru
      _
    // Predicated region
    $region18: #{tpu_custom_call.1} parent=1 // pred_check
      _
    $region19: #{tpu_custom_call.1} parent=1 // pred_check_branch
      %37 = sbr.rel (0) target = $region21
    $region20: #{tpu_custom_call.1} parent=1 // pred_region
      %38 = dma.done [#allocation6], 128
    $region21: #{tpu_custom_call.1} parent=1 // pred_fallthru
      _
    %v39 = vld [vmem:[#allocation2] sm:$0x1]
    %v40 = vmax.f32 %v39, 0.0
    %v41 = vld [vmem:[#allocation5] sm:$0xff]
    %v42 = vld [vmem:[%s2] sm:$0x1]
    %vm43 = vcmask 64512
    %v45 = vsel %vm43, %v40, 0
    %47 = vmatprep.subr.mxu0 0.0
    %48 = vmatpush1.msra.mxu0 %v41
    %49 = vmatprep.subr.mxu0 0.0
    %50 = vmatpush1.msra.mxu0 0.0
    %51 = vmatprep.subr.mxu0 0.0
    %52 = vmatpush1.msra.mxu0 0.0
    %53 = vmatprep.subr.mxu0 0.0
    %54 = vmatpush1.msra.mxu0 0.0
    %55 = vmatprep.subr.mxu0 0.0
    %56 = vmatpush1.msra.mxu0 0.0
    %57 = vmatprep.subr.mxu0 0.0
    %58 = vmatpush1.msra.mxu0 0.0
    %59 = vmatprep.subr.mxu0 0.0
    %60 = vmatpush1.msra.mxu0 0.0
    %61 = vmatprep.subr.mxu0 0.0
    %62 = vmatpush1.msra.mxu0 0.0
    %63 = vmatprep.subr.mxu0 0.0
    %64 = vmatpush1.msra.mxu0 0.0
    %65 = vmatprep.subr.mxu0 0.0
    %66 = vmatpush1.msra.mxu0 0.0
    %67 = vmatprep.subr.mxu0 0.0
    %68 = vmatpush1.msra.mxu0 0.0
    %69 = vmatprep.subr.mxu0 0.0
    %70 = vmatpush1.msra.mxu0 0.0
    %71 = vmatprep.subr.mxu0 0.0
    %72 = vmatpush1.msra.mxu0 0.0
    %73 = vmatprep.subr.mxu0 0.0
    %74 = vmatpush1.msra.mxu0 0.0
    %75 = vmatprep.subr.mxu0 0.0
    %76 = vmatpush1.msra.mxu0 0.0
    %77 = vmatprep.subr.mxu0 0.0
    %78 = vmatpush1.msra.mxu0 0.0
    %79 = vmatprep.subr.mxu0 0.0
    %80 = vmatpush1.msra.mxu0 0.0
    %81 = vmatprep.subr.mxu0 0.0
    %82 = vmatpush1.msra.mxu0 0.0
    %83 = vmatprep.subr.mxu0 0.0
    %84 = vmatpush1.msra.mxu0 0.0
    %85 = vmatprep.subr.mxu0 0.0
    %86 = vmatpush1.msra.mxu0 0.0
    %87 = vmatprep.subr.mxu0 0.0
    %88 = vmatpush1.msra.mxu0 0.0
    %89 = vmatprep.subr.mxu0 0.0
    %90 = vmatpush1.msra.mxu0 0.0
    %91 = vmatprep.subr.mxu0 0.0
    %92 = vmatpush1.msra.mxu0 0.0
    %93 = vmatprep.subr.mxu0 0.0
    %94 = vmatpush1.msra.mxu0 0.0
    %95 = vmatprep.subr.mxu0 0.0
    %96 = vmatpush1.msra.mxu0 0.0
    %97 = vmatprep.subr.mxu0 0.0
    %98 = vmatpush1.msra.mxu0 0.0
    %99 = vmatprep.subr.mxu0 0.0
    %100 = vmatpush1.msra.mxu0 0.0
    %101 = vmatprep.subr.mxu0 0.0
    %102 = vmatpush1.msra.mxu0 0.0
    %103 = vmatprep.subr.mxu0 0.0
    %104 = vmatpush1.msra.mxu0 0.0
    %105 = vmatprep.subr.mxu0 0.0
    %106 = vmatpush1.msra.mxu0 0.0
    %107 = vmatprep.subr.mxu0 0.0
    %108 = vmatpush1.msra.mxu0 0.0
    %109 = vmatprep.subr.mxu0 0.0
    %110 = vmatpush1.msra.mxu0 0.0
    %111 = vmatprep.mubr.f32.mxu0 0.0
    %112 = vmatmul.mubr.f32.gmra.mrb[0].mxu0 %v45
    %v113 = vpop.f32.mrb[0].mxu0
    %v114 = vadd.f32 %v42, %v113
    %v115 = vpop.f32.mrb[0].mxu0
    %116 = vdwg.mxu0
    %vm117 = vcmask 909312
    %118 = vst.msk [vmem:[#allocation7] sm:$0x1] %vm117, %v114
    // Predicated region
    $region22: #{tpu_custom_call.1} parent=1 // pred_check
      _
    $region23: #{tpu_custom_call.1} parent=1 // pred_check_branch
      %120 = sbr.rel (0) target = $region25
    $region24: #{tpu_custom_call.1} parent=1 // pred_region
      %s122 = ssub.s32 16, 16
      %123 = vsyncadd [#allocation4], %s122
      %s125 = sshll.u32 [#allocation7], 4
      %s126 = int_to_ptr.vmem [resolvable:$true] %s125
      %128 = dma.vmem_to_hbm [thread:$0]  %s126, 16, %s3, [#allocation4]
    $region25: #{tpu_custom_call.1} parent=1 // pred_fallthru
      _
    // Predicated region
    $region26: #{tpu_custom_call.1} parent=1 // pred_check
      _
    $region27: #{tpu_custom_call.1} parent=1 // pred_check_branch
      %130 = sbr.rel (0) target = $region29
    $region28: #{tpu_custom_call.1} parent=1 // pred_region
      %131 = dma.done [#allocation4], 16
    $region29: #{tpu_custom_call.1} parent=1 // pred_fallthru
      _
    %132 = vsyncpa [#allocation3], 1
    %133 = vsyncpa [#allocation6], 1
    %134 = vsyncpa [#allocation4], 1

</llo_original>
